<compile_context>
chip_gen: v6e
topology: v6e:2x2x1
jax: 0.10.0
libtpu: 0.0.40
codegen_flags: <defaults>
</compile_context>

<pallas_src>
import math

import jax
import jax.numpy as jnp
from jax.experimental import pallas as pl
from jax.experimental.pallas import tpu as pltpu


def _pick_k_tile(K, min_itemsize, row_bytes, cap=4096,
                 vmem_budget=24 * 1024 * 1024):
    """Pick the K-tile: as large as the VMEM budget allows (<= cap).

    A full-K tile (tk == K) is always a legal block shape regardless of
    divisibility, so it is preferred whenever it fits; otherwise tk is a
    sublane-aligned cap and the grid uses pl.cdiv(K, tk) with Pallas' masked
    edge-block handling (no divisor requirement on K).
    """
    sub = max(8, 32 // max(min_itemsize, 1))          # 8 f32 / 16 bf16 / 32 i8
    rows_by_vmem = vmem_budget // (2 * max(row_bytes, 1))   # 2x: double-buffered
    cap = max(sub, min(cap, (rows_by_vmem // sub) * sub))
    if K <= cap:
        return K                                      # full dim: always legal
    return cap


def decoder_forward(mixture_w, est_mask, norm_coef, basis_weight, *, k_tile=None):
    """
    mixture_w   : [B, K, N]
    est_mask    : [B, K, nspk, N]   (native layout, NOT transposed)
    norm_coef   : [B, K, 1]
    basis_weight: [L, N]            (PyTorch nn.Linear(N, L).weight layout)
    returns     : [B, nspk, K, L]
    """
    B, K, N = mixture_w.shape
    nspk = est_mask.shape[2]
    L = basis_weight.shape[0]
    out_dtype = jnp.result_type(mixture_w.dtype, est_mask.dtype)

    # Dense DMA for the dominant stream: fold the speaker axis into the lane
    # axis. This is a contiguous reshape (no extra HBM pass).
    mask2d = est_mask.reshape(B, K, nspk * N)

    # Basis signals transposed once; tiny, constant block index -> stays
    # VMEM-resident across the whole grid.
    w_t = jnp.transpose(basis_weight, (1, 0))          # [N, L]

    isz = lambda a: jnp.dtype(a.dtype).itemsize
    osz = jnp.dtype(out_dtype).itemsize
    min_itemsize = min(isz(mixture_w), isz(est_mask), isz(norm_coef), osz)
    # Bytes streamed per K row across all tiles whose second-minor dim is tk.
    row_bytes = (N * isz(mixture_w) + nspk * N * isz(est_mask)
                 + isz(norm_coef) + nspk * L * osz)

    if k_tile is None:
        k_tile = _pick_k_tile(K, min_itemsize, row_bytes)
    tk = k_tile
    sub = max(8, 32 // max(min_itemsize, 1))           # dtype-dependent sublanes
    assert tk == K or tk % sub == 0, (
        f"k_tile={tk} must equal K={K} or be a multiple of {sub}")

    grid = (B, pl.cdiv(K, tk))                         # K need not divide evenly

    def kernel(mix_ref, mask_ref, norm_ref, w_ref, out_ref):
        # mix_ref : (tk, N)        mixture weights for this (batch, K-tile)
        # mask_ref: (tk, nspk*N)   all speakers' masks, one dense block
        # norm_ref: (tk, 1)        per-row norm coefficients
        # w_ref   : (N, L)         basis signals (transposed Linear weight)
        # out_ref : (nspk, tk, L)  tile already at its final [b, :, k] location
        scaled_mix = mix_ref[...] * norm_ref[...]      # fold norm pre-matmul, hoisted
        w = w_ref[...]
        for s in range(nspk):                          # static unroll, nspk is tiny
            src = scaled_mix * mask_ref[:, s * N:(s + 1) * N]
            out_ref[s] = jnp.dot(
                src, w, preferred_element_type=jnp.float32).astype(out_ref.dtype)

    cost = pl.CostEstimate(
        flops=2 * B * K * nspk * N * L,
        transcendentals=0,
        bytes_accessed=(est_mask.size * isz(est_mask)
                        + mixture_w.size * isz(mixture_w)
                        + norm_coef.size * isz(norm_coef)
                        + w_t.size * isz(w_t)
                        + B * nspk * K * L * osz),
    )

    return pl.pallas_call(
        kernel,
        out_shape=jax.ShapeDtypeStruct((B, nspk, K, L), out_dtype),
        grid=grid,
        in_specs=[
            # mixture_w [B, K, N]
            pl.BlockSpec((None, tk, N), lambda b, kt: (b, kt, 0)),
            # est_mask folded to [B, K, nspk*N]: one dense contiguous DMA
            pl.BlockSpec((None, tk, nspk * N), lambda b, kt: (b, kt, 0)),
            # norm_coef [B, K, 1]
            pl.BlockSpec((None, tk, 1), lambda b, kt: (b, kt, 0)),
            # weight [N, L]: constant block index -> VMEM-resident
            pl.BlockSpec((N, L), lambda b, kt: (0, 0)),
        ],
        # Output block lands at its final [b, 0:nspk, k_tile, 0:L] spot, so the
        # PyTorch permute(0,2,1,3) is absorbed here.
        out_specs=pl.BlockSpec((None, nspk, tk, L), lambda b, kt: (b, 0, kt, 0)),
        compiler_params=pltpu.CompilerParams(
            dimension_semantics=("parallel", "parallel")),
        cost_estimate=cost,
    )(mixture_w, mask2d, norm_coef, w_t)


def decoder_reference(mixture_w, est_mask, norm_coef, basis_weight):
    """Pure-JAX reference mirroring the PyTorch forward exactly."""
    source_w = mixture_w[:, :, None, :] * est_mask                    # [B,K,nspk,N]
    est_source = jnp.einsum('bksn,ln->bksl', source_w, basis_weight)  # Linear, no bias
    est_source = est_source * norm_coef[:, :, None, :]                # [B,K,1,1] bcast
    return jnp.transpose(est_source, (0, 2, 1, 3))                    # [B,nspk,K,L]


if __name__ == "__main__":
    key = jax.random.PRNGKey(0)
    k_mix, k_mask, k_norm, k_w = jax.random.split(key, 4)

    # Small shapes consistent with the module's forward.
    B, K, nspk, N, L = 2, 256, 2, 40, 32

    mixture_w = jax.random.normal(k_mix, (B, K, N), dtype=jnp.float32)
    est_mask = jax.nn.softmax(
        jax.random.normal(k_mask, (B, K, nspk, N), dtype=jnp.float32), axis=2)
    norm_coef = jnp.abs(jax.random.normal(k_norm, (B, K, 1), dtype=jnp.float32)) + 0.1
    # Deterministic Linear(N, L, bias=False) weight, PyTorch layout [L, N].
    basis_weight = jax.random.normal(k_w, (L, N), dtype=jnp.float32) * (1.0 / math.sqrt(N))

    # Case 1: default (full-K) tile.
    out = decoder_forward(mixture_w, est_mask, norm_coef, basis_weight)
    out = jax.block_until_ready(out)
    ref = decoder_reference(mixture_w, est_mask, norm_coef, basis_weight)
    assert out.shape == (B, nspk, K, L), out.shape
    assert jnp.allclose(out, ref, atol=1e-4, rtol=1e-4), \
        float(jnp.max(jnp.abs(out - ref)))

    # Case 2: awkward K (not a multiple of 8) with an explicit small tile ->
    # exercises the pl.cdiv grid with a partial edge block (no divisor
    # requirement on K).
    K2 = 200
    mix2 = mixture_w[:, :K2]
    mask2 = est_mask[:, :K2]
    norm2 = norm_coef[:, :K2]
    out2 = decoder_forward(mix2, mask2, norm2, basis_weight, k_tile=64)
    out2 = jax.block_until_ready(out2)
    ref2 = decoder_reference(mix2, mask2, norm2, basis_weight)
    assert out2.shape == (B, nspk, K2, L), out2.shape
    assert jnp.allclose(out2, ref2, atol=1e-4, rtol=1e-4), \
        float(jnp.max(jnp.abs(out2 - ref2)))

    print("KERNEL_OK")
</pallas_src>

<mosaic_0001>
module attributes {stable_mosaic.version = 11 : i64} {
  func.func @kernel(%arg0: i32, %arg1: i32, %arg2: memref<1x256x40xf32, #tpu.memory_space<vmem>>, %arg3: memref<1x256x80xf32, #tpu.memory_space<vmem>>, %arg4: memref<1x256x1xf32, #tpu.memory_space<vmem>>, %arg5: memref<40x32xf32, #tpu.memory_space<vmem>>, %arg6: memref<1x2x256x32xf32, #tpu.memory_space<vmem>>) attributes {dimension_semantics = [#tpu.dimension_semantics<parallel>, #tpu.dimension_semantics<parallel>], iteration_bounds = array<i64: 2, 1>, scalar_prefetch = 0 : i64, scratch_operands = 0 : i64, tpu.core_type = #tpu.core_type<tc>, window_params = [{transform_indices = @transform_0, window_bounds = array<i64: 1, 256, 40>}, {transform_indices = @transform_1, window_bounds = array<i64: 1, 256, 80>}, {transform_indices = @transform_2, window_bounds = array<i64: 1, 256, 1>}, {pipeline_mode = #tpu.pipeline_mode<synchronous>, transform_indices = @transform_3, window_bounds = array<i64: 40, 32>}, {transform_indices = @transform_4, window_bounds = array<i64: 1, 2, 256, 32>}]} {
    %c0 = arith.constant 0 : index
    %c0_0 = arith.constant 0 : index
    %c0_1 = arith.constant 0 : index
    %0 = vector.load %arg2[%c0, %c0_0, %c0_1] : memref<1x256x40xf32, #tpu.memory_space<vmem>>, vector<1x256x40xf32>
    %1 = vector.shape_cast %0 : vector<1x256x40xf32> to vector<256x40xf32>
    %c0_2 = arith.constant 0 : index
    %c0_3 = arith.constant 0 : index
    %c0_4 = arith.constant 0 : index
    %2 = vector.load %arg4[%c0_2, %c0_3, %c0_4] : memref<1x256x1xf32, #tpu.memory_space<vmem>>, vector<1x256x1xf32>
    %3 = vector.shape_cast %2 : vector<1x256x1xf32> to vector<256x1xf32>
    %4 = vector.broadcast %3 : vector<256x1xf32> to vector<256x40xf32>
    %5 = arith.mulf %1, %4 : vector<256x40xf32>
    %c0_5 = arith.constant 0 : index
    %c0_6 = arith.constant 0 : index
    %6 = vector.load %arg5[%c0_5, %c0_6] : memref<40x32xf32, #tpu.memory_space<vmem>>, vector<40x32xf32>
    %c0_7 = arith.constant 0 : index
    %c0_8 = arith.constant 0 : index
    %c0_9 = arith.constant 0 : index
    %7 = vector.load %arg3[%c0_7, %c0_8, %c0_9] : memref<1x256x80xf32, #tpu.memory_space<vmem>>, vector<1x256x40xf32>
    %8 = vector.shape_cast %7 : vector<1x256x40xf32> to vector<256x40xf32>
    %9 = arith.mulf %5, %8 : vector<256x40xf32>
    %cst = arith.constant dense<0.000000e+00> : vector<256x32xf32>
    %10 = tpu.matmul %9, %6, %cst {dimension_numbers = #tpu.dot_dimension_numbers<[1], [0], [0], [1], [0, 0, 1, 1], [], []>} : vector<256x40xf32>, vector<40x32xf32>, vector<256x32xf32> -> vector<256x32xf32>
    %c0_10 = arith.constant 0 : index
    %c0_11 = arith.constant 0 : index
    %c0_12 = arith.constant 0 : index
    %c0_13 = arith.constant 0 : index
    %11 = vector.load %arg6[%c0_10, %c0_11, %c0_12, %c0_13] : memref<1x2x256x32xf32, #tpu.memory_space<vmem>>, vector<1x1x256x32xf32>
    %12 = vector.shape_cast %11 : vector<1x1x256x32xf32> to vector<256x32xf32>
    %13 = vector.shape_cast %10 : vector<256x32xf32> to vector<1x1x256x32xf32>
    tpu.vector_store %arg6[%c0_10, %c0_11, %c0_12, %c0_13], %13 {strides = array<i32>} : memref<1x2x256x32xf32, #tpu.memory_space<vmem>>, vector<1x1x256x32xf32>,
    %c0_14 = arith.constant 0 : index
    %c0_15 = arith.constant 0 : index
    %c40 = arith.constant 40 : index
    %14 = vector.load %arg3[%c0_14, %c0_15, %c40] : memref<1x256x80xf32, #tpu.memory_space<vmem>>, vector<1x256x40xf32>
    %15 = vector.shape_cast %14 : vector<1x256x40xf32> to vector<256x40xf32>
    %16 = arith.mulf %5, %15 : vector<256x40xf32>
    %cst_16 = arith.constant dense<0.000000e+00> : vector<256x32xf32>
    %17 = tpu.matmul %16, %6, %cst_16 {dimension_numbers = #tpu.dot_dimension_numbers<[1], [0], [0], [1], [0, 0, 1, 1], [], []>} : vector<256x40xf32>, vector<40x32xf32>, vector<256x32xf32> -> vector<256x32xf32>
    %c0_17 = arith.constant 0 : index
    %c1 = arith.constant 1 : index
    %c0_18 = arith.constant 0 : index
    %c0_19 = arith.constant 0 : index
    %18 = vector.load %arg6[%c0_17, %c1, %c0_18, %c0_19] : memref<1x2x256x32xf32, #tpu.memory_space<vmem>>, vector<1x1x256x32xf32>
    %19 = vector.shape_cast %18 : vector<1x1x256x32xf32> to vector<256x32xf32>
    %20 = vector.shape_cast %17 : vector<256x32xf32> to vector<1x1x256x32xf32>
    tpu.vector_store %arg6[%c0_17, %c1, %c0_18, %c0_19], %20 {strides = array<i32>} : memref<1x2x256x32xf32, #tpu.memory_space<vmem>>, vector<1x1x256x32xf32>,
    return
  }
  func.func @transform_0(%arg0: i32, %arg1: i32) -> (i32, i32, i32) {
    %c0_i32 = arith.constant 0 : i32
    %c0_i32_0 = arith.constant 0 : i32
    return %arg0, %arg1, %c0_i32 : i32, i32, i32
  }
  func.func @transform_1(%arg0: i32, %arg1: i32) -> (i32, i32, i32) {
    %c0_i32 = arith.constant 0 : i32
    %c0_i32_0 = arith.constant 0 : i32
    return %arg0, %arg1, %c0_i32 : i32, i32, i32
  }
  func.func @transform_2(%arg0: i32, %arg1: i32) -> (i32, i32, i32) {
    %c0_i32 = arith.constant 0 : i32
    %c0_i32_0 = arith.constant 0 : i32
    return %arg0, %arg1, %c0_i32 : i32, i32, i32
  }
  func.func @transform_3(%arg0: i32, %arg1: i32) -> (i32, i32) {
    %c0_i32 = arith.constant 0 : i32
    %c0_i32_0 = arith.constant 0 : i32
    %c0_i32_1 = arith.constant 0 : i32
    return %c0_i32, %c0_i32_0 : i32, i32
  }
  func.func @transform_4(%arg0: i32, %arg1: i32) -> (i32, i32, i32, i32) {
    %c0_i32 = arith.constant 0 : i32
    %c0_i32_0 = arith.constant 0 : i32
    %c0_i32_1 = arith.constant 0 : i32
    return %arg0, %c0_i32, %arg1, %c0_i32_0 : i32, i32, i32, i32
  }
}

</mosaic_0001>

<llo_original>
// kernel: tpu_custom_call.1
$region0: #{tpu_custom_call.1}
  #allocation0 [shape = 'u32[]', space=smem, size = 0x4, offset = 0x4, fixed_abs, tag = 'smem constant byte address 0x4 - core index']
  #allocation1 [shape = 'u32[144,128]{1,0:T(1,128)}', space=vmem, size = 0x12000, scoped, tag = 'internal scratch']
  %s0 = inlined_call_operand.vmem [shape: f32[2,256,40], index: 0, kind: input, shape index: {}]
  %s1 = inlined_call_operand.vmem [shape: f32[2,256,80], index: 1, kind: input, shape index: {}]
  %s2 = inlined_call_operand.vmem [shape: f32[2,256,1], index: 2, kind: input, shape index: {}]
  %s3 = inlined_call_operand.vmem [shape: f32[40,32], index: 3, kind: input, shape index: {}]
  %s4 = inlined_call_operand.vmem [shape: f32[2,2,256,32], index: 4, kind: output, shape index: {}]
  %s5 = sld [smem:[#allocation0]]
  $region49: #{tpu_custom_call.1} parent=0
    _
  %s7 = ssub.s32 1, %s5
  %s8 = scalar_select 0, %s7, %s5
  loop: start=0, step=1, limit=4
  $region2: #{tpu_custom_call.1} parent=0 // loop_pre_header
    _
  $region3: #{tpu_custom_call.1} parent=0 // loop_header
    %s10 = sphi 0, %s14
    %p11 = scmp.ge.s32.totalorder %s10, 4
    %s17 = sphi 0, %s29
    %s18 = sphi 0, %s25
    %s19 = sphi 0, %s17
    %s20 = sphi 0, %s18
    %s21 = sphi 0, %s19
    %s22 = sphi 0, %s20
    %s34 = sphi 0, %s36
    %s37 = sphi 0, %s34
    %s38 = sphi 0, %s37
    %s54 = sphi 0, %s38
    %s62 = sphi 0, %s64
    %s65 = sphi 0, %s62
    %s66 = sphi 0, %s65
    %s82 = sphi 0, %s66
    %s90 = sphi 0, %s92
    %s93 = sphi 0, %s90
    %s94 = sphi 0, %s93
    %s110 = sphi 0, %s94
    %s114 = sphi 0, %s114
    %s116 = sphi 0, %s114
    %s117 = sphi 0, %s116
    %s131 = sphi 0, %s117
    %s139 = sphi 0, %s141
    %s142 = sphi 0, %s139
    %s143 = sphi 0, %s142
    %s159 = sphi 0, %s143
  $region4: #{tpu_custom_call.1} parent=0 // loop_header_branch
    %13 = sbr.rel (%p11) target = $region8
  $region5: #{tpu_custom_call.1} parent=0 // loop_body
    %s15 = ssub.s32 %s10, 1
    %s16 = ssub.s32 %s10, 2
    %s23 = sadd.s32 1, %s18
    %p24 = scmp.ge.s32.totalorder %s23, 1
    %s25 = scalar_select %p24, 0, %s23
    %s26 = sadd.s32 1, %s17
    %s27 = scalar_select %p24, %s26, %s17
    %p28 = scmp.ge.s32.totalorder %s27, 2
    %s29 = scalar_select %p28, 0, %s27
    %s30 = ssub.s32 %s17, %s29
    %s31 = ssub.s32 %s18, %s25
    %s32 = sor.u32 %s30, %s31
    %p33 = scmp.eq.s32.totalorder %s32, 0
    %s35 = sadd.s32 %s34, 1
    %s36 = scalar_select %p33, %s34, %s35
    %p39 = pneg %p33
    %p40 = scmp.eq.s32.totalorder %s10, 1
    %p41 = por %p39, %p40
    %p42 = scmp.ne.s32.totalorder %s34, %s37
    %p43 = scmp.eq.s32.totalorder %s10, 0
    %p44 = por %p42, %p43
    %p45 = scmp.ne.s32.totalorder %s34, %s37
    %p46 = scmp.eq.s32.totalorder %s15, 1
    %p47 = por %p45, %p46
    %p48 = scmp.ne.s32.totalorder %s37, %s38
    %p49 = scmp.eq.s32.totalorder %s15, 0
    %p50 = por %p48, %p49
    %p51 = scmp.ne.s32.totalorder %s37, %s38
    %p52 = scmp.eq.s32.totalorder %s16, 1
    %p53 = por %p51, %p52
    %p55 = scmp.ne.s32.totalorder %s38, %s54
    %p56 = scmp.eq.s32.totalorder %s16, 0
    %p57 = por %p55, %p56
    %s58 = ssub.s32 %s17, %s29
    %s59 = ssub.s32 %s18, %s25
    %s60 = sor.u32 %s58, %s59
    %p61 = scmp.eq.s32.totalorder %s60, 0
    %s63 = sadd.s32 %s62, 1
    %s64 = scalar_select %p61, %s62, %s63
    %p67 = pneg %p61
    %p68 = scmp.eq.s32.totalorder %s10, 1
    %p69 = por %p67, %p68
    %p70 = scmp.ne.s32.totalorder %s62, %s65
    %p71 = scmp.eq.s32.totalorder %s10, 0
    %p72 = por %p70, %p71
    %p73 = scmp.ne.s32.totalorder %s62, %s65
    %p74 = scmp.eq.s32.totalorder %s15, 1
    %p75 = por %p73, %p74
    %p76 = scmp.ne.s32.totalorder %s65, %s66
    %p77 = scmp.eq.s32.totalorder %s15, 0
    %p78 = por %p76, %p77
    %p79 = scmp.ne.s32.totalorder %s65, %s66
    %p80 = scmp.eq.s32.totalorder %s16, 1
    %p81 = por %p79, %p80
    %p83 = scmp.ne.s32.totalorder %s66, %s82
    %p84 = scmp.eq.s32.totalorder %s16, 0
    %p85 = por %p83, %p84
    %s86 = ssub.s32 %s17, %s29
    %s87 = ssub.s32 %s18, %s25
    %s88 = sor.u32 %s86, %s87
    %p89 = scmp.eq.s32.totalorder %s88, 0
    %s91 = sadd.s32 %s90, 1
    %s92 = scalar_select %p89, %s90, %s91
    %p95 = pneg %p89
    %p96 = scmp.eq.s32.totalorder %s10, 1
    %p97 = por %p95, %p96
    %p98 = scmp.ne.s32.totalorder %s90, %s93
    %p99 = scmp.eq.s32.totalorder %s10, 0
    %p100 = por %p98, %p99
    %p101 = scmp.ne.s32.totalorder %s90, %s93
    %p102 = scmp.eq.s32.totalorder %s15, 1
    %p103 = por %p101, %p102
    %p104 = scmp.ne.s32.totalorder %s93, %s94
    %p105 = scmp.eq.s32.totalorder %s15, 0
    %p106 = por %p104, %p105
    %p107 = scmp.ne.s32.totalorder %s93, %s94
    %p108 = scmp.eq.s32.totalorder %s16, 1
    %p109 = por %p107, %p108
    %p111 = scmp.ne.s32.totalorder %s94, %s110
    %p112 = scmp.eq.s32.totalorder %s16, 0
    %p113 = por %p111, %p112
    %s115 = sadd.s32 %s114, 1
    %p118 = scmp.eq.s32.totalorder %s10, 1
    %p119 = scmp.ne.s32.totalorder %s114, %s116
    %p120 = scmp.eq.s32.totalorder %s10, 0
    %p121 = por %p119, %p120
    %p122 = scmp.ne.s32.totalorder %s114, %s116
    %p123 = scmp.eq.s32.totalorder %s15, 1
    %p124 = por %p122, %p123
    %p125 = scmp.ne.s32.totalorder %s116, %s117
    %p126 = scmp.eq.s32.totalorder %s15, 0
    %p127 = por %p125, %p126
    %p128 = scmp.ne.s32.totalorder %s116, %s117
    %p129 = scmp.eq.s32.totalorder %s16, 1
    %p130 = por %p128, %p129
    %p132 = scmp.ne.s32.totalorder %s117, %s131
    %p133 = scmp.eq.s32.totalorder %s16, 0
    %p134 = por %p132, %p133
    %s135 = ssub.s32 %s17, %s29
    %s136 = ssub.s32 %s18, %s25
    %s137 = sor.u32 %s135, %s136
    %p138 = scmp.eq.s32.totalorder %s137, 0
    %s140 = sadd.s32 %s139, 1
    %s141 = scalar_select %p138, %s139, %s140
    %p144 = pneg %p138
    %p145 = scmp.eq.s32.totalorder %s10, 1
    %p146 = por %p144, %p145
    %p147 = scmp.ne.s32.totalorder %s139, %s142
    %p148 = scmp.eq.s32.totalorder %s10, 0
    %p149 = por %p147, %p148
    %p150 = scmp.ne.s32.totalorder %s139, %s142
    %p151 = scmp.eq.s32.totalorder %s15, 1
    %p152 = por %p150, %p151
    %p153 = scmp.ne.s32.totalorder %s142, %s143
    %p154 = scmp.eq.s32.totalorder %s15, 0
    %p155 = por %p153, %p154
    %p156 = scmp.ne.s32.totalorder %s142, %s143
    %p157 = scmp.eq.s32.totalorder %s16, 1
    %p158 = por %p156, %p157
    %p160 = scmp.ne.s32.totalorder %s143, %s159
    %p161 = scmp.eq.s32.totalorder %s16, 0
    %p162 = por %p160, %p161
    %p163 = scmp.le.s32.totalorder 1, %s10
    %p164 = scmp.lt.s32.totalorder %s10, 3
    %p165 = pnand %p163, %p164
    %p166 = pneg %p165
    // Predicated region
    $region9: #{tpu_custom_call.1} parent=5 // pred_check
      _
    $region10: #{tpu_custom_call.1} parent=5 // pred_check_branch
      %168 = sbr.rel (%p165) target = $region12
    $region11: #{tpu_custom_call.1} parent=5 // pred_region
      %s169 = ssub.s32 %s10, 1
      // Predicated region
      $region13: #{tpu_custom_call.1} parent=11 // pred_check
        %p170 = pneg %p127
      $region14: #{tpu_custom_call.1} parent=11 // pred_check_branch
        %172 = sbr.rel (%p170) target = $region16
      $region15: #{tpu_custom_call.1} parent=11 // pred_region
        _
      $region16: #{tpu_custom_call.1} parent=11 // pred_fallthru
        _
    $region12: #{tpu_custom_call.1} parent=5 // pred_fallthru
      _
    %p173 = scmp.lt.s32.totalorder %s10, 2
    // Predicated region
    $region17: #{tpu_custom_call.1} parent=5 // pred_check
      %p174 = pneg %p173
    $region18: #{tpu_custom_call.1} parent=5 // pred_check_branch
      %176 = sbr.rel (%p174) target = $region20
    $region19: #{tpu_custom_call.1} parent=5 // pred_region
      // Predicated region
      $region21: #{tpu_custom_call.1} parent=19 // pred_check
        %p177 = pneg %p44
      $region22: #{tpu_custom_call.1} parent=19 // pred_check_branch
        %179 = sbr.rel (%p177) target = $region24
      $region23: #{tpu_custom_call.1} parent=19 // pred_region
        %s180 = smul.u32 32, %s18
        %p181 = scmp.lt.s32.totalorder %s17, 1
        %s182 = scalar_select %p181, %s17, 1
        %p183 = scmp.lt.s32.totalorder %s180, 31
        %s184 = scalar_select %p183, %s180, 31
        %s185 = smul.addr %s182, 32
        %s186 = sadd.s32 %s184, %s185
        %s187 = smul.addr %s186, 8
        %s188 = scalar_lea.vmem %s0, %s187
        %s189 = smul.u32 32, %s18
      $region24: #{tpu_custom_call.1} parent=19 // pred_fallthru
        _
      // Predicated region
      $region25: #{tpu_custom_call.1} parent=19 // pred_check
        %p190 = pneg %p72
      $region26: #{tpu_custom_call.1} parent=19 // pred_check_branch
        %192 = sbr.rel (%p190) target = $region28
      $region27: #{tpu_custom_call.1} parent=19 // pred_region
        %s193 = smul.u32 32, %s18
        %p194 = scmp.lt.s32.totalorder %s17, 1
        %s195 = scalar_select %p194, %s17, 1
        %p196 = scmp.lt.s32.totalorder %s193, 31
        %s197 = scalar_select %p196, %s193, 31
        %s198 = smul.addr %s195, 32
        %s199 = sadd.s32 %s197, %s198
        %s200 = smul.addr %s199, 8
        %s201 = scalar_lea.vmem %s1, %s200
        %s202 = smul.u32 32, %s18
      $region28: #{tpu_custom_call.1} parent=19 // pred_fallthru
        _
      // Predicated region
      $region29: #{tpu_custom_call.1} parent=19 // pred_check
        %p203 = pneg %p100
      $region30: #{tpu_custom_call.1} parent=19 // pred_check_branch
        %205 = sbr.rel (%p203) target = $region32
      $region31: #{tpu_custom_call.1} parent=19 // pred_region
        %s206 = smul.u32 32, %s18
        %p207 = scmp.lt.s32.totalorder %s17, 1
        %s208 = scalar_select %p207, %s17, 1
        %p209 = scmp.lt.s32.totalorder %s206, 31
        %s210 = scalar_select %p209, %s206, 31
        %s211 = smul.addr %s208, 32
        %s212 = sadd.s32 %s210, %s211
        %s213 = smul.addr %s212, 8
        %s214 = scalar_lea.vmem %s2, %s213
        %s215 = smul.u32 32, %s18
      $region32: #{tpu_custom_call.1} parent=19 // pred_fallthru
        _
    $region20: #{tpu_custom_call.1} parent=5 // pred_fallthru
      _
    %p216 = scmp.le.s32.totalorder 1, %s10
    %p217 = scmp.lt.s32.totalorder %s10, 3
    %p218 = pnand %p216, %p217
    %p219 = pneg %p218
    // Predicated region
    $region33: #{tpu_custom_call.1} parent=5 // pred_check
      _
    $region34: #{tpu_custom_call.1} parent=5 // pred_check_branch
      %221 = sbr.rel (%p218) target = $region36
    $region35: #{tpu_custom_call.1} parent=5 // pred_region
      %s222 = ssub.s32 %s10, 1
      %s223 = smul.u32 32, %s20
      %p224 = scmp.lt.s32.totalorder %s19, 1
      %s225 = scalar_select %p224, %s19, 1
      %p226 = scmp.lt.s32.totalorder %s223, 31
      %s227 = scalar_select %p226, %s223, 31
      %s228 = smul.addr %s225, 32
      %s229 = sadd.s32 %s227, %s228
      %s230 = smul.addr %s229, 8
      %s231 = scalar_lea.vmem %s0, %s230
      %p232 = pneg %p50
      %p233 = pneg %p47
      %s234 = smul.u32 32, %s20
      %p235 = scmp.lt.s32.totalorder %s19, 1
      %s236 = scalar_select %p235, %s19, 1
      %p237 = scmp.lt.s32.totalorder %s234, 31
      %s238 = scalar_select %p237, %s234, 31
      %s239 = smul.addr %s236, 32
      %s240 = sadd.s32 %s238, %s239
      %s241 = smul.addr %s240, 8
      %s242 = scalar_lea.vmem %s1, %s241
      %p243 = pneg %p78
      %p244 = pneg %p75
      %s245 = smul.u32 32, %s20
      %p246 = scmp.lt.s32.totalorder %s19, 1
      %s247 = scalar_select %p246, %s19, 1
      %p248 = scmp.lt.s32.totalorder %s245, 31
      %s249 = scalar_select %p248, %s245, 31
      %s250 = smul.addr %s247, 32
      %s251 = sadd.s32 %s249, %s250
      %s252 = smul.addr %s251, 8
      %s253 = scalar_lea.vmem %s2, %s252
      %p254 = pneg %p106
      %p255 = pneg %p103
      %p256 = pneg %p127
      %p257 = pneg %p124
      %p258 = pneg %p155
      %p259 = pneg %p152
      %s260 = smul.u32 32, %s20
      %p261 = scmp.lt.s32.totalorder %s19, 1
      %s262 = scalar_select %p261, %s19, 1
      %p263 = scmp.lt.s32.totalorder %s260, 31
      %s264 = scalar_select %p263, %s260, 31
      %s265 = smul.addr %s262, 64
      %s266 = sadd.s32 %s264, %s265
      %s267 = smul.addr %s266, 8
      %s268 = scalar_lea.vmem %s4, %s267
      %s269 = smul.u32 32, %s20
      %p270 = scmp.lt.s32.totalorder %s19, 1
      %s271 = scalar_select %p270, %s19, 1
      %p272 = scmp.lt.s32.totalorder %s269, 31
      %s273 = scalar_select %p272, %s269, 31
      %s274 = smul.addr %s271, 32
      %s275 = sadd.s32 %s273, %s274
      %s276 = smul.addr %s275, 8
      %s277 = scalar_lea.vmem %s0, %s276
      %s278 = smul.u32 32, %s20
      %s279 = smul.u32 32, %s20
      %p280 = scmp.lt.s32.totalorder %s19, 1
      %s281 = scalar_select %p280, %s19, 1
      %p282 = scmp.lt.s32.totalorder %s279, 31
      %s283 = scalar_select %p282, %s279, 31
      %s284 = smul.addr %s281, 32
      %s285 = sadd.s32 %s283, %s284
      %s286 = smul.addr %s285, 8
      %s287 = scalar_lea.vmem %s1, %s286
      %s288 = smul.u32 32, %s20
      %s289 = smul.u32 32, %s20
      %p290 = scmp.lt.s32.totalorder %s19, 1
      %s291 = scalar_select %p290, %s19, 1
      %p292 = scmp.lt.s32.totalorder %s289, 31
      %s293 = scalar_select %p292, %s289, 31
      %s294 = smul.addr %s291, 32
      %s295 = sadd.s32 %s293, %s294
      %s296 = smul.addr %s295, 8
      %s297 = scalar_lea.vmem %s2, %s296
      %s298 = smul.u32 32, %s20
      %s299 = smul.u32 32, %s20
      %p300 = scmp.lt.s32.totalorder %s19, 1
      %s301 = scalar_select %p300, %s19, 1
      %p302 = scmp.lt.s32.totalorder %s299, 31
      %s303 = scalar_select %p302, %s299, 31
      %s304 = smul.addr %s301, 64
      %s305 = sadd.s32 %s303, %s304
      %s306 = smul.addr %s305, 8
      %s307 = scalar_lea.vmem %s4, %s306
      %s308 = smul.u32 32, %s20
      %v309 = vld [vmem:[%s277] sm:$0xff]
      %v310 = vld [vmem:[%s277 + $0x8] sm:$0xff]
      %v311 = vld [vmem:[%s277 + $0x10] sm:$0xff]
      %v312 = vld [vmem:[%s277 + $0x18] sm:$0xff]
      %v313 = vld [vmem:[%s277 + $0x20] sm:$0xff]
      %v314 = vld [vmem:[%s277 + $0x28] sm:$0xff]
      %v315 = vld [vmem:[%s277 + $0x30] sm:$0xff]
      %v316 = vld [vmem:[%s277 + $0x38] sm:$0xff]
      %v317 = vld [vmem:[%s277 + $0x40] sm:$0xff]
      %v318 = vld [vmem:[%s277 + $0x48] sm:$0xff]
      %v319 = vld [vmem:[%s277 + $0x50] sm:$0xff]
      %v320 = vld [vmem:[%s277 + $0x58] sm:$0xff]
      %v321 = vld [vmem:[%s277 + $0x60] sm:$0xff]
      %v322 = vld [vmem:[%s277 + $0x68] sm:$0xff]
      %v323 = vld [vmem:[%s277 + $0x70] sm:$0xff]
      %v324 = vld [vmem:[%s277 + $0x78] sm:$0xff]
      %v325 = vld [vmem:[%s277 + $0x80] sm:$0xff]
      %v326 = vld [vmem:[%s277 + $0x88] sm:$0xff]
      %v327 = vld [vmem:[%s277 + $0x90] sm:$0xff]
      %v328 = vld [vmem:[%s277 + $0x98] sm:$0xff]
      %v329 = vld [vmem:[%s277 + $0xa0] sm:$0xff]
      %v330 = vld [vmem:[%s277 + $0xa8] sm:$0xff]
      %v331 = vld [vmem:[%s277 + $0xb0] sm:$0xff]
      %v332 = vld [vmem:[%s277 + $0xb8] sm:$0xff]
      %v333 = vld [vmem:[%s277 + $0xc0] sm:$0xff]
      %v334 = vld [vmem:[%s277 + $0xc8] sm:$0xff]
      %v335 = vld [vmem:[%s277 + $0xd0] sm:$0xff]
      %v336 = vld [vmem:[%s277 + $0xd8] sm:$0xff]
      %v337 = vld [vmem:[%s277 + $0xe0] sm:$0xff]
      %v338 = vld [vmem:[%s277 + $0xe8] sm:$0xff]
      %v339 = vld [vmem:[%s277 + $0xf0] sm:$0xff]
      %v340 = vld [vmem:[%s277 + $0xf8] sm:$0xff]
      %v341 = vld [vmem:[%s297] sm:$0xff]
      %v342 = vld [vmem:[%s297 + $0x8] sm:$0xff]
      %v343 = vld [vmem:[%s297 + $0x10] sm:$0xff]
      %v344 = vld [vmem:[%s297 + $0x18] sm:$0xff]
      %v345 = vld [vmem:[%s297 + $0x20] sm:$0xff]
      %v346 = vld [vmem:[%s297 + $0x28] sm:$0xff]
      %v347 = vld [vmem:[%s297 + $0x30] sm:$0xff]
      %v348 = vld [vmem:[%s297 + $0x38] sm:$0xff]
      %v349 = vld [vmem:[%s297 + $0x40] sm:$0xff]
      %v350 = vld [vmem:[%s297 + $0x48] sm:$0xff]
      %v351 = vld [vmem:[%s297 + $0x50] sm:$0xff]
      %v352 = vld [vmem:[%s297 + $0x58] sm:$0xff]
      %v353 = vld [vmem:[%s297 + $0x60] sm:$0xff]
      %v354 = vld [vmem:[%s297 + $0x68] sm:$0xff]
      %v355 = vld [vmem:[%s297 + $0x70] sm:$0xff]
      %v356 = vld [vmem:[%s297 + $0x78] sm:$0xff]
      %v357 = vld [vmem:[%s297 + $0x80] sm:$0xff]
      %v358 = vld [vmem:[%s297 + $0x88] sm:$0xff]
      %v359 = vld [vmem:[%s297 + $0x90] sm:$0xff]
      %v360 = vld [vmem:[%s297 + $0x98] sm:$0xff]
      %v361 = vld [vmem:[%s297 + $0xa0] sm:$0xff]
      %v362 = vld [vmem:[%s297 + $0xa8] sm:$0xff]
      %v363 = vld [vmem:[%s297 + $0xb0] sm:$0xff]
      %v364 = vld [vmem:[%s297 + $0xb8] sm:$0xff]
      %v365 = vld [vmem:[%s297 + $0xc0] sm:$0xff]
      %v366 = vld [vmem:[%s297 + $0xc8] sm:$0xff]
      %v367 = vld [vmem:[%s297 + $0xd0] sm:$0xff]
      %v368 = vld [vmem:[%s297 + $0xd8] sm:$0xff]
      %v369 = vld [vmem:[%s297 + $0xe0] sm:$0xff]
      %v370 = vld [vmem:[%s297 + $0xe8] sm:$0xff]
      %v371 = vld [vmem:[%s297 + $0xf0] sm:$0xff]
      %v372 = vld [vmem:[%s297 + $0xf8] sm:$0xff]
      %374 = vset.pattern.permute.xlu0 0
      %375 = vperm.xlu0 %374, %v341
      %v376 = vpop.permute.xlu0 %375
      %379 = vset.pattern.permute.xlu0 0
      %380 = vperm.xlu0 %379, %v342
      %v381 = vpop.permute.xlu0 %380
      %384 = vset.pattern.permute.xlu0 0
      %385 = vperm.xlu0 %384, %v343
      %v386 = vpop.permute.xlu0 %385
      %389 = vset.pattern.permute.xlu0 0
      %390 = vperm.xlu0 %389, %v344
      %v391 = vpop.permute.xlu0 %390
      %394 = vset.pattern.permute.xlu0 0
      %395 = vperm.xlu0 %394, %v345
      %v396 = vpop.permute.xlu0 %395
      %399 = vset.pattern.permute.xlu0 0
      %400 = vperm.xlu0 %399, %v346
      %v401 = vpop.permute.xlu0 %400
      %404 = vset.pattern.permute.xlu0 0
      %405 = vperm.xlu0 %404, %v347
      %v406 = vpop.permute.xlu0 %405
      %409 = vset.pattern.permute.xlu0 0
      %410 = vperm.xlu0 %409, %v348
      %v411 = vpop.permute.xlu0 %410
      %414 = vset.pattern.permute.xlu0 0
      %415 = vperm.xlu0 %414, %v349
      %v416 = vpop.permute.xlu0 %415
      %419 = vset.pattern.permute.xlu0 0
      %420 = vperm.xlu0 %419, %v350
      %v421 = vpop.permute.xlu0 %420
      %424 = vset.pattern.permute.xlu0 0
      %425 = vperm.xlu0 %424, %v351
      %v426 = vpop.permute.xlu0 %425
      %429 = vset.pattern.permute.xlu0 0
      %430 = vperm.xlu0 %429, %v352
      %v431 = vpop.permute.xlu0 %430
      %434 = vset.pattern.permute.xlu0 0
      %435 = vperm.xlu0 %434, %v353
      %v436 = vpop.permute.xlu0 %435
      %439 = vset.pattern.permute.xlu0 0
      %440 = vperm.xlu0 %439, %v354
      %v441 = vpop.permute.xlu0 %440
      %444 = vset.pattern.permute.xlu0 0
      %445 = vperm.xlu0 %444, %v355
      %v446 = vpop.permute.xlu0 %445
      %449 = vset.pattern.permute.xlu0 0
      %450 = vperm.xlu0 %449, %v356
      %v451 = vpop.permute.xlu0 %450
      %454 = vset.pattern.permute.xlu0 0
      %455 = vperm.xlu0 %454, %v357
      %v456 = vpop.permute.xlu0 %455
      %459 = vset.pattern.permute.xlu0 0
      %460 = vperm.xlu0 %459, %v358
      %v461 = vpop.permute.xlu0 %460
      %464 = vset.pattern.permute.xlu0 0
      %465 = vperm.xlu0 %464, %v359
      %v466 = vpop.permute.xlu0 %465
      %469 = vset.pattern.permute.xlu0 0
      %470 = vperm.xlu0 %469, %v360
      %v471 = vpop.permute.xlu0 %470
      %474 = vset.pattern.permute.xlu0 0
      %475 = vperm.xlu0 %474, %v361
      %v476 = vpop.permute.xlu0 %475
      %479 = vset.pattern.permute.xlu0 0
      %480 = vperm.xlu0 %479, %v362
      %v481 = vpop.permute.xlu0 %480
      %484 = vset.pattern.permute.xlu0 0
      %485 = vperm.xlu0 %484, %v363
      %v486 = vpop.permute.xlu0 %485
      %489 = vset.pattern.permute.xlu0 0
      %490 = vperm.xlu0 %489, %v364
      %v491 = vpop.permute.xlu0 %490
      %494 = vset.pattern.permute.xlu0 0
      %495 = vperm.xlu0 %494, %v365
      %v496 = vpop.permute.xlu0 %495
      %499 = vset.pattern.permute.xlu0 0
      %500 = vperm.xlu0 %499, %v366
      %v501 = vpop.permute.xlu0 %500
      %504 = vset.pattern.permute.xlu0 0
      %505 = vperm.xlu0 %504, %v367
      %v506 = vpop.permute.xlu0 %505
      %509 = vset.pattern.permute.xlu0 0
      %510 = vperm.xlu0 %509, %v368
      %v511 = vpop.permute.xlu0 %510
      %514 = vset.pattern.permute.xlu0 0
      %515 = vperm.xlu0 %514, %v369
      %v516 = vpop.permute.xlu0 %515
      %519 = vset.pattern.permute.xlu0 0
      %520 = vperm.xlu0 %519, %v370
      %v521 = vpop.permute.xlu0 %520
      %524 = vset.pattern.permute.xlu0 0
      %525 = vperm.xlu0 %524, %v371
      %v526 = vpop.permute.xlu0 %525
      %529 = vset.pattern.permute.xlu0 0
      %530 = vperm.xlu0 %529, %v372
      %v531 = vpop.permute.xlu0 %530
      %v533 = vmul.f32 %v309, %v376
      %v534 = vmul.f32 %v310, %v381
      %v535 = vmul.f32 %v311, %v386
      %v536 = vmul.f32 %v312, %v391
      %v537 = vmul.f32 %v313, %v396
      %v538 = vmul.f32 %v314, %v401
      %v539 = vmul.f32 %v315, %v406
      %v540 = vmul.f32 %v316, %v411
      %v541 = vmul.f32 %v317, %v416
      %v542 = vmul.f32 %v318, %v421
      %v543 = vmul.f32 %v319, %v426
      %v544 = vmul.f32 %v320, %v431
      %v545 = vmul.f32 %v321, %v436
      %v546 = vmul.f32 %v322, %v441
      %v547 = vmul.f32 %v323, %v446
      %v548 = vmul.f32 %v324, %v451
      %v549 = vmul.f32 %v325, %v456
      %v550 = vmul.f32 %v326, %v461
      %v551 = vmul.f32 %v327, %v466
      %v552 = vmul.f32 %v328, %v471
      %v553 = vmul.f32 %v329, %v476
      %v554 = vmul.f32 %v330, %v481
      %v555 = vmul.f32 %v331, %v486
      %v556 = vmul.f32 %v332, %v491
      %v557 = vmul.f32 %v333, %v496
      %v558 = vmul.f32 %v334, %v501
      %v559 = vmul.f32 %v335, %v506
      %v560 = vmul.f32 %v336, %v511
      %v561 = vmul.f32 %v337, %v516
      %v562 = vmul.f32 %v338, %v521
      %v563 = vmul.f32 %v339, %v526
      %v564 = vmul.f32 %v340, %v531
      %v565 = vld [vmem:[%s3] sm:$0xff]
      %v566 = vld [vmem:[%s3 + $0x8] sm:$0xff]
      %v567 = vld [vmem:[%s3 + $0x10] sm:$0xff]
      %v568 = vld [vmem:[%s3 + $0x18] sm:$0xff]
      %v569 = vld [vmem:[%s3 + $0x20] sm:$0xff]
      %v570 = vld [vmem:[%s287] sm:$0xff]
      %v571 = vld [vmem:[%s287 + $0x8] sm:$0xff]
      %v572 = vld [vmem:[%s287 + $0x10] sm:$0xff]
      %v573 = vld [vmem:[%s287 + $0x18] sm:$0xff]
      %v574 = vld [vmem:[%s287 + $0x20] sm:$0xff]
      %v575 = vld [vmem:[%s287 + $0x28] sm:$0xff]
      %v576 = vld [vmem:[%s287 + $0x30] sm:$0xff]
      %v577 = vld [vmem:[%s287 + $0x38] sm:$0xff]
      %v578 = vld [vmem:[%s287 + $0x40] sm:$0xff]
      %v579 = vld [vmem:[%s287 + $0x48] sm:$0xff]
      %v580 = vld [vmem:[%s287 + $0x50] sm:$0xff]
      %v581 = vld [vmem:[%s287 + $0x58] sm:$0xff]
      %v582 = vld [vmem:[%s287 + $0x60] sm:$0xff]
      %v583 = vld [vmem:[%s287 + $0x68] sm:$0xff]
      %v584 = vld [vmem:[%s287 + $0x70] sm:$0xff]
      %v585 = vld [vmem:[%s287 + $0x78] sm:$0xff]
      %v586 = vld [vmem:[%s287 + $0x80] sm:$0xff]
      %v587 = vld [vmem:[%s287 + $0x88] sm:$0xff]
      %v588 = vld [vmem:[%s287 + $0x90] sm:$0xff]
      %v589 = vld [vmem:[%s287 + $0x98] sm:$0xff]
      %v590 = vld [vmem:[%s287 + $0xa0] sm:$0xff]
      %v591 = vld [vmem:[%s287 + $0xa8] sm:$0xff]
      %v592 = vld [vmem:[%s287 + $0xb0] sm:$0xff]
      %v593 = vld [vmem:[%s287 + $0xb8] sm:$0xff]
      %v594 = vld [vmem:[%s287 + $0xc0] sm:$0xff]
      %v595 = vld [vmem:[%s287 + $0xc8] sm:$0xff]
      %v596 = vld [vmem:[%s287 + $0xd0] sm:$0xff]
      %v597 = vld [vmem:[%s287 + $0xd8] sm:$0xff]
      %v598 = vld [vmem:[%s287 + $0xe0] sm:$0xff]
      %v599 = vld [vmem:[%s287 + $0xe8] sm:$0xff]
      %v600 = vld [vmem:[%s287 + $0xf0] sm:$0xff]
      %v601 = vld [vmem:[%s287 + $0xf8] sm:$0xff]
      %v602 = vmul.f32 %v533, %v570
      %v603 = vmul.f32 %v534, %v571
      %v604 = vmul.f32 %v535, %v572
      %v605 = vmul.f32 %v536, %v573
      %v606 = vmul.f32 %v537, %v574
      %v607 = vmul.f32 %v538, %v575
      %v608 = vmul.f32 %v539, %v576
      %v609 = vmul.f32 %v540, %v577
      %v610 = vmul.f32 %v541, %v578
      %v611 = vmul.f32 %v542, %v579
      %v612 = vmul.f32 %v543, %v580
      %v613 = vmul.f32 %v544, %v581
      %v614 = vmul.f32 %v545, %v582
      %v615 = vmul.f32 %v546, %v583
      %v616 = vmul.f32 %v547, %v584
      %v617 = vmul.f32 %v548, %v585
      %v618 = vmul.f32 %v549, %v586
      %v619 = vmul.f32 %v550, %v587
      %v620 = vmul.f32 %v551, %v588
      %v621 = vmul.f32 %v552, %v589
      %v622 = vmul.f32 %v553, %v590
      %v623 = vmul.f32 %v554, %v591
      %v624 = vmul.f32 %v555, %v592
      %v625 = vmul.f32 %v556, %v593
      %v626 = vmul.f32 %v557, %v594
      %v627 = vmul.f32 %v558, %v595
      %v628 = vmul.f32 %v559, %v596
      %v629 = vmul.f32 %v560, %v597
      %v630 = vmul.f32 %v561, %v598
      %v631 = vmul.f32 %v562, %v599
      %v632 = vmul.f32 %v563, %v600
      %v633 = vmul.f32 %v564, %v601
      %vm634 = vcmask 326656
      %v636 = vsel %vm634, %v602, 0
      %v639 = vsel %vm634, %v603, 0
      %v642 = vsel %vm634, %v604, 0
      %v645 = vsel %vm634, %v605, 0
      %v648 = vsel %vm634, %v606, 0
      %v651 = vsel %vm634, %v607, 0
      %v654 = vsel %vm634, %v608, 0
      %v657 = vsel %vm634, %v609, 0
      %v660 = vsel %vm634, %v610, 0
      %v663 = vsel %vm634, %v611, 0
      %v666 = vsel %vm634, %v612, 0
      %v669 = vsel %vm634, %v613, 0
      %v672 = vsel %vm634, %v614, 0
      %v675 = vsel %vm634, %v615, 0
      %v678 = vsel %vm634, %v616, 0
      %v681 = vsel %vm634, %v617, 0
      %v684 = vsel %vm634, %v618, 0
      %v687 = vsel %vm634, %v619, 0
      %v690 = vsel %vm634, %v620, 0
      %v693 = vsel %vm634, %v621, 0
      %v696 = vsel %vm634, %v622, 0
      %v699 = vsel %vm634, %v623, 0
      %v702 = vsel %vm634, %v624, 0
      %v705 = vsel %vm634, %v625, 0
      %v708 = vsel %vm634, %v626, 0
      %v711 = vsel %vm634, %v627, 0
      %v714 = vsel %vm634, %v628, 0
      %v717 = vsel %vm634, %v629, 0
      %v720 = vsel %vm634, %v630, 0
      %v723 = vsel %vm634, %v631, 0
      %v726 = vsel %vm634, %v632, 0
      %v729 = vsel %vm634, %v633, 0
      %731 = vmatprep.subr.mxu0 0.0
      %732 = vmatpush1.msra.mxu0 0.0
      %733 = vmatprep.subr.mxu0 0.0
      %734 = vmatpush1.msra.mxu0 0.0
      %735 = vmatprep.subr.mxu0 0.0
      %736 = vmatpush1.msra.mxu0 0.0
      %737 = vmatprep.subr.mxu0 0.0
      %738 = vmatpush1.msra.mxu0 0.0
      %739 = vmatprep.subr.mxu0 0.0
      %740 = vmatpush1.msra.mxu0 0.0
      %741 = vmatprep.subr.mxu0 0.0
      %742 = vmatpush1.msra.mxu0 0.0
      %743 = vmatprep.subr.mxu0 0.0
      %744 = vmatpush1.msra.mxu0 0.0
      %745 = vmatprep.subr.mxu0 0.0
      %746 = vmatpush1.msra.mxu0 0.0
      %747 = vmatprep.subr.mxu0 0.0
      %748 = vmatpush1.msra.mxu0 0.0
      %749 = vmatprep.subr.mxu0 0.0
      %750 = vmatpush1.msra.mxu0 0.0
      %751 = vmatprep.subr.mxu0 0.0
      %752 = vmatpush1.msra.mxu0 0.0
      %753 = vmatprep.subr.mxu0 0.0
      %754 = vmatpush1.msra.mxu0 %v569
      %755 = vmatprep.subr.mxu0 0.0
      %756 = vmatpush1.msra.mxu0 %v568
      %757 = vmatprep.subr.mxu0 0.0
      %758 = vmatpush1.msra.mxu0 %v567
      %759 = vmatprep.subr.mxu0 0.0
      %760 = vmatpush1.msra.mxu0 %v566
      %761 = vmatprep.subr.mxu0 0.0
      %762 = vmatpush1.msra.mxu0 %v565
      %763 = vmatprep.subr.mxu0 0.0
      %764 = vmatpush2.msra.mxu0 0.0
      %765 = vmatprep.subr.mxu0 0.0
      %766 = vmatpush2.msra.mxu0 0.0
      %767 = vmatprep.subr.mxu0 0.0
      %768 = vmatpush2.msra.mxu0 0.0
      %769 = vmatprep.subr.mxu0 0.0
      %770 = vmatpush2.msra.mxu0 0.0
      %771 = vmatprep.subr.mxu0 0.0
      %772 = vmatpush2.msra.mxu0 0.0
      %773 = vmatprep.subr.mxu0 0.0
      %774 = vmatpush2.msra.mxu0 0.0
      %775 = vmatprep.subr.mxu0 0.0
      %776 = vmatpush2.msra.mxu0 0.0
      %777 = vmatprep.subr.mxu0 0.0
      %778 = vmatpush2.msra.mxu0 0.0
      %779 = vmatprep.subr.mxu0 0.0
      %780 = vmatpush2.msra.mxu0 0.0
      %781 = vmatprep.subr.mxu0 0.0
      %782 = vmatpush2.msra.mxu0 0.0
      %783 = vmatprep.subr.mxu0 0.0
      %784 = vmatpush2.msra.mxu0 0.0
      %785 = vmatprep.subr.mxu0 0.0
      %786 = vmatpush2.msra.mxu0 0.0
      %787 = vmatprep.subr.mxu0 0.0
      %788 = vmatpush2.msra.mxu0 0.0
      %789 = vmatprep.subr.mxu0 0.0
      %790 = vmatpush2.msra.mxu0 0.0
      %791 = vmatprep.subr.mxu0 0.0
      %792 = vmatpush2.msra.mxu0 0.0
      %793 = vmatprep.subr.mxu0 0.0
      %794 = vmatpush2.msra.mxu0 0.0
      %795 = vmatprep.mubr.f32.mxu0 0.0
      %796 = vmatmul.mubr.f32.gmra.mxu0 %v636
      %v797 = vpop.f32.mrf.mxu0
      %v798 = vadd.f32 0.0, %v797
      %v799 = vpop.f32.mrf.mxu0
      %800 = vmatprep.mubr.f32.mxu0 0.0
      %801 = vmatmul.mubr.f32.gmra.mxu0 %v639
      %v802 = vpop.f32.mrf.mxu0
      %v803 = vadd.f32 0.0, %v802
      %v804 = vpop.f32.mrf.mxu0
      %805 = vmatprep.mubr.f32.mxu0 0.0
      %806 = vmatmul.mubr.f32.gmra.mxu0 %v642
      %v807 = vpop.f32.mrf.mxu0
      %v808 = vadd.f32 0.0, %v807
      %v809 = vpop.f32.mrf.mxu0
      %810 = vmatprep.mubr.f32.mxu0 0.0
      %811 = vmatmul.mubr.f32.gmra.mxu0 %v645
      %v812 = vpop.f32.mrf.mxu0
      %v813 = vadd.f32 0.0, %v812
      %v814 = vpop.f32.mrf.mxu0
      %815 = vmatprep.mubr.f32.mxu0 0.0
      %816 = vmatmul.mubr.f32.gmra.mxu0 %v648
      %v817 = vpop.f32.mrf.mxu0
      %v818 = vadd.f32 0.0, %v817
      %v819 = vpop.f32.mrf.mxu0
      %820 = vmatprep.mubr.f32.mxu0 0.0
      %821 = vmatmul.mubr.f32.gmra.mxu0 %v651
      %v822 = vpop.f32.mrf.mxu0
      %v823 = vadd.f32 0.0, %v822
      %v824 = vpop.f32.mrf.mxu0
      %825 = vmatprep.mubr.f32.mxu0 0.0
      %826 = vmatmul.mubr.f32.gmra.mxu0 %v654
      %v827 = vpop.f32.mrf.mxu0
      %v828 = vadd.f32 0.0, %v827
      %v829 = vpop.f32.mrf.mxu0
      %830 = vmatprep.mubr.f32.mxu0 0.0
      %831 = vmatmul.mubr.f32.gmra.mxu0 %v657
      %v832 = vpop.f32.mrf.mxu0
      %v833 = vadd.f32 0.0, %v832
      %v834 = vpop.f32.mrf.mxu0
      %835 = vmatprep.mubr.f32.mxu0 0.0
      %836 = vmatmul.mubr.f32.gmra.mxu0 %v660
      %v837 = vpop.f32.mrf.mxu0
      %v838 = vadd.f32 0.0, %v837
      %v839 = vpop.f32.mrf.mxu0
      %840 = vmatprep.mubr.f32.mxu0 0.0
      %841 = vmatmul.mubr.f32.gmra.mxu0 %v663
      %v842 = vpop.f32.mrf.mxu0
      %v843 = vadd.f32 0.0, %v842
      %v844 = vpop.f32.mrf.mxu0
      %845 = vmatprep.mubr.f32.mxu0 0.0
      %846 = vmatmul.mubr.f32.gmra.mxu0 %v666
      %v847 = vpop.f32.mrf.mxu0
      %v848 = vadd.f32 0.0, %v847
      %v849 = vpop.f32.mrf.mxu0
      %850 = vmatprep.mubr.f32.mxu0 0.0
      %851 = vmatmul.mubr.f32.gmra.mxu0 %v669
      %v852 = vpop.f32.mrf.mxu0
      %v853 = vadd.f32 0.0, %v852
      %v854 = vpop.f32.mrf.mxu0
      %855 = vmatprep.mubr.f32.mxu0 0.0
      %856 = vmatmul.mubr.f32.gmra.mxu0 %v672
      %v857 = vpop.f32.mrf.mxu0
      %v858 = vadd.f32 0.0, %v857
      %v859 = vpop.f32.mrf.mxu0
      %860 = vmatprep.mubr.f32.mxu0 0.0
      %861 = vmatmul.mubr.f32.gmra.mxu0 %v675
      %v862 = vpop.f32.mrf.mxu0
      %v863 = vadd.f32 0.0, %v862
      %v864 = vpop.f32.mrf.mxu0
      %865 = vmatprep.mubr.f32.mxu0 0.0
      %866 = vmatmul.mubr.f32.gmra.mxu0 %v678
      %v867 = vpop.f32.mrf.mxu0
      %v868 = vadd.f32 0.0, %v867
      %v869 = vpop.f32.mrf.mxu0
      %870 = vmatprep.mubr.f32.mxu0 0.0
      %871 = vmatmul.mubr.f32.gmra.mxu0 %v681
      %v872 = vpop.f32.mrf.mxu0
      %v873 = vadd.f32 0.0, %v872
      %v874 = vpop.f32.mrf.mxu0
      %875 = vmatprep.mubr.f32.mxu0 0.0
      %876 = vmatmul.mubr.f32.gmra.mxu0 %v684
      %v877 = vpop.f32.mrf.mxu0
      %v878 = vadd.f32 0.0, %v877
      %v879 = vpop.f32.mrf.mxu0
      %880 = vmatprep.mubr.f32.mxu0 0.0
      %881 = vmatmul.mubr.f32.gmra.mxu0 %v687
      %v882 = vpop.f32.mrf.mxu0
      %v883 = vadd.f32 0.0, %v882
      %v884 = vpop.f32.mrf.mxu0
      %885 = vmatprep.mubr.f32.mxu0 0.0
      %886 = vmatmul.mubr.f32.gmra.mxu0 %v690
      %v887 = vpop.f32.mrf.mxu0
      %v888 = vadd.f32 0.0, %v887
      %v889 = vpop.f32.mrf.mxu0
      %890 = vmatprep.mubr.f32.mxu0 0.0
      %891 = vmatmul.mubr.f32.gmra.mxu0 %v693
      %v892 = vpop.f32.mrf.mxu0
      %v893 = vadd.f32 0.0, %v892
      %v894 = vpop.f32.mrf.mxu0
      %895 = vmatprep.mubr.f32.mxu0 0.0
      %896 = vmatmul.mubr.f32.gmra.mxu0 %v696
      %v897 = vpop.f32.mrf.mxu0
      %v898 = vadd.f32 0.0, %v897
      %v899 = vpop.f32.mrf.mxu0
      %900 = vmatprep.mubr.f32.mxu0 0.0
      %901 = vmatmul.mubr.f32.gmra.mxu0 %v699
      %v902 = vpop.f32.mrf.mxu0
      %v903 = vadd.f32 0.0, %v902
      %v904 = vpop.f32.mrf.mxu0
      %905 = vmatprep.mubr.f32.mxu0 0.0
      %906 = vmatmul.mubr.f32.gmra.mxu0 %v702
      %v907 = vpop.f32.mrf.mxu0
      %v908 = vadd.f32 0.0, %v907
      %v909 = vpop.f32.mrf.mxu0
      %910 = vmatprep.mubr.f32.mxu0 0.0
      %911 = vmatmul.mubr.f32.gmra.mxu0 %v705
      %v912 = vpop.f32.mrf.mxu0
      %v913 = vadd.f32 0.0, %v912
      %v914 = vpop.f32.mrf.mxu0
      %915 = vmatprep.mubr.f32.mxu0 0.0
      %916 = vmatmul.mubr.f32.gmra.mxu0 %v708
      %v917 = vpop.f32.mrf.mxu0
      %v918 = vadd.f32 0.0, %v917
      %v919 = vpop.f32.mrf.mxu0
      %920 = vmatprep.mubr.f32.mxu0 0.0
      %921 = vmatmul.mubr.f32.gmra.mxu0 %v711
      %v922 = vpop.f32.mrf.mxu0
      %v923 = vadd.f32 0.0, %v922
      %v924 = vpop.f32.mrf.mxu0
      %925 = vmatprep.mubr.f32.mxu0 0.0
      %926 = vmatmul.mubr.f32.gmra.mxu0 %v714
      %v927 = vpop.f32.mrf.mxu0
      %v928 = vadd.f32 0.0, %v927
      %v929 = vpop.f32.mrf.mxu0
      %930 = vmatprep.mubr.f32.mxu0 0.0
      %931 = vmatmul.mubr.f32.gmra.mxu0 %v717
      %v932 = vpop.f32.mrf.mxu0
      %v933 = vadd.f32 0.0, %v932
      %v934 = vpop.f32.mrf.mxu0
      %935 = vmatprep.mubr.f32.mxu0 0.0
      %936 = vmatmul.mubr.f32.gmra.mxu0 %v720
      %v937 = vpop.f32.mrf.mxu0
      %v938 = vadd.f32 0.0, %v937
      %v939 = vpop.f32.mrf.mxu0
      %940 = vmatprep.mubr.f32.mxu0 0.0
      %941 = vmatmul.mubr.f32.gmra.mxu0 %v723
      %v942 = vpop.f32.mrf.mxu0
      %v943 = vadd.f32 0.0, %v942
      %v944 = vpop.f32.mrf.mxu0
      %945 = vmatprep.mubr.f32.mxu0 0.0
      %946 = vmatmul.mubr.f32.gmra.mxu0 %v726
      %v947 = vpop.f32.mrf.mxu0
      %v948 = vadd.f32 0.0, %v947
      %v949 = vpop.f32.mrf.mxu0
      %950 = vmatprep.mubr.f32.mxu0 0.0
      %951 = vmatmul.mubr.f32.gmra.mxu0 %v729
      %v952 = vpop.f32.mrf.mxu0
      %v953 = vadd.f32 0.0, %v952
      %v954 = vpop.f32.mrf.mxu0
      %955 = vdwg.mxu0
      %vm956 = vcmask 261120
      %957 = vst.msk [vmem:[%s307] sm:$0xff] %vm956, %v798
      %958 = vst.msk [vmem:[%s307 + $0x8] sm:$0xff] %vm956, %v803
      %959 = vst.msk [vmem:[%s307 + $0x10] sm:$0xff] %vm956, %v808
      %960 = vst.msk [vmem:[%s307 + $0x18] sm:$0xff] %vm956, %v813
      %961 = vst.msk [vmem:[%s307 + $0x20] sm:$0xff] %vm956, %v818
      %962 = vst.msk [vmem:[%s307 + $0x28] sm:$0xff] %vm956, %v823
      %963 = vst.msk [vmem:[%s307 + $0x30] sm:$0xff] %vm956, %v828
      %964 = vst.msk [vmem:[%s307 + $0x38] sm:$0xff] %vm956, %v833
      %965 = vst.msk [vmem:[%s307 + $0x40] sm:$0xff] %vm956, %v838
      %966 = vst.msk [vmem:[%s307 + $0x48] sm:$0xff] %vm956, %v843
      %967 = vst.msk [vmem:[%s307 + $0x50] sm:$0xff] %vm956, %v848
      %968 = vst.msk [vmem:[%s307 + $0x58] sm:$0xff] %vm956, %v853
      %969 = vst.msk [vmem:[%s307 + $0x60] sm:$0xff] %vm956, %v858
      %970 = vst.msk [vmem:[%s307 + $0x68] sm:$0xff] %vm956, %v863
      %971 = vst.msk [vmem:[%s307 + $0x70] sm:$0xff] %vm956, %v868
      %972 = vst.msk [vmem:[%s307 + $0x78] sm:$0xff] %vm956, %v873
      %973 = vst.msk [vmem:[%s307 + $0x80] sm:$0xff] %vm956, %v878
      %974 = vst.msk [vmem:[%s307 + $0x88] sm:$0xff] %vm956, %v883
      %975 = vst.msk [vmem:[%s307 + $0x90] sm:$0xff] %vm956, %v888
      %976 = vst.msk [vmem:[%s307 + $0x98] sm:$0xff] %vm956, %v893
      %977 = vst.msk [vmem:[%s307 + $0xa0] sm:$0xff] %vm956, %v898
      %978 = vst.msk [vmem:[%s307 + $0xa8] sm:$0xff] %vm956, %v903
      %979 = vst.msk [vmem:[%s307 + $0xb0] sm:$0xff] %vm956, %v908
      %980 = vst.msk [vmem:[%s307 + $0xb8] sm:$0xff] %vm956, %v913
      %981 = vst.msk [vmem:[%s307 + $0xc0] sm:$0xff] %vm956, %v918
      %982 = vst.msk [vmem:[%s307 + $0xc8] sm:$0xff] %vm956, %v923
      %983 = vst.msk [vmem:[%s307 + $0xd0] sm:$0xff] %vm956, %v928
      %984 = vst.msk [vmem:[%s307 + $0xd8] sm:$0xff] %vm956, %v933
      %985 = vst.msk [vmem:[%s307 + $0xe0] sm:$0xff] %vm956, %v938
      %986 = vst.msk [vmem:[%s307 + $0xe8] sm:$0xff] %vm956, %v943
      %987 = vst.msk [vmem:[%s307 + $0xf0] sm:$0xff] %vm956, %v948
      %988 = vst.msk [vmem:[%s307 + $0xf8] sm:$0xff] %vm956, %v953
      %v989 = vld [vmem:[%s287] sm:$0xff]
      %v990 = vld [vmem:[%s287 + $0x8] sm:$0xff]
      %v991 = vld [vmem:[%s287 + $0x10] sm:$0xff]
      %v992 = vld [vmem:[%s287 + $0x18] sm:$0xff]
      %v993 = vld [vmem:[%s287 + $0x20] sm:$0xff]
      %v994 = vld [vmem:[%s287 + $0x28] sm:$0xff]
      %v995 = vld [vmem:[%s287 + $0x30] sm:$0xff]
      %v996 = vld [vmem:[%s287 + $0x38] sm:$0xff]
      %v997 = vld [vmem:[%s287 + $0x40] sm:$0xff]
      %v998 = vld [vmem:[%s287 + $0x48] sm:$0xff]
      %v999 = vld [vmem:[%s287 + $0x50] sm:$0xff]
      %v1000 = vld [vmem:[%s287 + $0x58] sm:$0xff]
      %v1001 = vld [vmem:[%s287 + $0x60] sm:$0xff]
      %v1002 = vld [vmem:[%s287 + $0x68] sm:$0xff]
      %v1003 = vld [vmem:[%s287 + $0x70] sm:$0xff]
      %v1004 = vld [vmem:[%s287 + $0x78] sm:$0xff]
      %v1005 = vld [vmem:[%s287 + $0x80] sm:$0xff]
      %v1006 = vld [vmem:[%s287 + $0x88] sm:$0xff]
      %v1007 = vld [vmem:[%s287 + $0x90] sm:$0xff]
      %v1008 = vld [vmem:[%s287 + $0x98] sm:$0xff]
      %v1009 = vld [vmem:[%s287 + $0xa0] sm:$0xff]
      %v1010 = vld [vmem:[%s287 + $0xa8] sm:$0xff]
      %v1011 = vld [vmem:[%s287 + $0xb0] sm:$0xff]
      %v1012 = vld [vmem:[%s287 + $0xb8] sm:$0xff]
      %v1013 = vld [vmem:[%s287 + $0xc0] sm:$0xff]
      %v1014 = vld [vmem:[%s287 + $0xc8] sm:$0xff]
      %v1015 = vld [vmem:[%s287 + $0xd0] sm:$0xff]
      %v1016 = vld [vmem:[%s287 + $0xd8] sm:$0xff]
      %v1017 = vld [vmem:[%s287 + $0xe0] sm:$0xff]
      %v1018 = vld [vmem:[%s287 + $0xe8] sm:$0xff]
      %v1019 = vld [vmem:[%s287 + $0xf0] sm:$0xff]
      %v1020 = vld [vmem:[%s287 + $0xf8] sm:$0xff]
      %1053 = vrot.lane.b32.xlu0 %v989, 88
      %v1054 = vpop.permute.xlu0 %1053
      %1055 = vrot.lane.b32.xlu0 %v990, 88
      %v1056 = vpop.permute.xlu0 %1055
      %1057 = vrot.lane.b32.xlu0 %v991, 88
      %v1058 = vpop.permute.xlu0 %1057
      %1059 = vrot.lane.b32.xlu0 %v992, 88
      %v1060 = vpop.permute.xlu0 %1059
      %1061 = vrot.lane.b32.xlu0 %v993, 88
      %v1062 = vpop.permute.xlu0 %1061
      %1063 = vrot.lane.b32.xlu0 %v994, 88
      %v1064 = vpop.permute.xlu0 %1063
      %1065 = vrot.lane.b32.xlu0 %v995, 88
      %v1066 = vpop.permute.xlu0 %1065
      %1067 = vrot.lane.b32.xlu0 %v996, 88
      %v1068 = vpop.permute.xlu0 %1067
      %1069 = vrot.lane.b32.xlu0 %v997, 88
      %v1070 = vpop.permute.xlu0 %1069
      %1071 = vrot.lane.b32.xlu0 %v998, 88
      %v1072 = vpop.permute.xlu0 %1071
      %1073 = vrot.lane.b32.xlu0 %v999, 88
      %v1074 = vpop.permute.xlu0 %1073
      %1075 = vrot.lane.b32.xlu0 %v1000, 88
      %v1076 = vpop.permute.xlu0 %1075
      %1077 = vrot.lane.b32.xlu0 %v1001, 88
      %v1078 = vpop.permute.xlu0 %1077
      %1079 = vrot.lane.b32.xlu0 %v1002, 88
      %v1080 = vpop.permute.xlu0 %1079
      %1081 = vrot.lane.b32.xlu0 %v1003, 88
      %v1082 = vpop.permute.xlu0 %1081
      %1083 = vrot.lane.b32.xlu0 %v1004, 88
      %v1084 = vpop.permute.xlu0 %1083
      %1085 = vrot.lane.b32.xlu0 %v1005, 88
      %v1086 = vpop.permute.xlu0 %1085
      %1087 = vrot.lane.b32.xlu0 %v1006, 88
      %v1088 = vpop.permute.xlu0 %1087
      %1089 = vrot.lane.b32.xlu0 %v1007, 88
      %v1090 = vpop.permute.xlu0 %1089
      %1091 = vrot.lane.b32.xlu0 %v1008, 88
      %v1092 = vpop.permute.xlu0 %1091
      %1093 = vrot.lane.b32.xlu0 %v1009, 88
      %v1094 = vpop.permute.xlu0 %1093
      %1095 = vrot.lane.b32.xlu0 %v1010, 88
      %v1096 = vpop.permute.xlu0 %1095
      %1097 = vrot.lane.b32.xlu0 %v1011, 88
      %v1098 = vpop.permute.xlu0 %1097
      %1099 = vrot.lane.b32.xlu0 %v1012, 88
      %v1100 = vpop.permute.xlu0 %1099
      %1101 = vrot.lane.b32.xlu0 %v1013, 88
      %v1102 = vpop.permute.xlu0 %1101
      %1103 = vrot.lane.b32.xlu0 %v1014, 88
      %v1104 = vpop.permute.xlu0 %1103
      %1105 = vrot.lane.b32.xlu0 %v1015, 88
      %v1106 = vpop.permute.xlu0 %1105
      %1107 = vrot.lane.b32.xlu0 %v1016, 88
      %v1108 = vpop.permute.xlu0 %1107
      %1109 = vrot.lane.b32.xlu0 %v1017, 88
      %v1110 = vpop.permute.xlu0 %1109
      %1111 = vrot.lane.b32.xlu0 %v1018, 88
      %v1112 = vpop.permute.xlu0 %1111
      %1113 = vrot.lane.b32.xlu0 %v1019, 88
      %v1114 = vpop.permute.xlu0 %1113
      %1115 = vrot.lane.b32.xlu0 %v1020, 88
      %v1116 = vpop.permute.xlu0 %1115
      %v1149 = vmul.f32 %v533, %v1054
      %v1150 = vmul.f32 %v534, %v1056
      %v1151 = vmul.f32 %v535, %v1058
      %v1152 = vmul.f32 %v536, %v1060
      %v1153 = vmul.f32 %v537, %v1062
      %v1154 = vmul.f32 %v538, %v1064
      %v1155 = vmul.f32 %v539, %v1066
      %v1156 = vmul.f32 %v540, %v1068
      %v1157 = vmul.f32 %v541, %v1070
      %v1158 = vmul.f32 %v542, %v1072
      %v1159 = vmul.f32 %v543, %v1074
      %v1160 = vmul.f32 %v544, %v1076
      %v1161 = vmul.f32 %v545, %v1078
      %v1162 = vmul.f32 %v546, %v1080
      %v1163 = vmul.f32 %v547, %v1082
      %v1164 = vmul.f32 %v548, %v1084
      %v1165 = vmul.f32 %v549, %v1086
      %v1166 = vmul.f32 %v550, %v1088
      %v1167 = vmul.f32 %v551, %v1090
      %v1168 = vmul.f32 %v552, %v1092
      %v1169 = vmul.f32 %v553, %v1094
      %v1170 = vmul.f32 %v554, %v1096
      %v1171 = vmul.f32 %v555, %v1098
      %v1172 = vmul.f32 %v556, %v1100
      %v1173 = vmul.f32 %v557, %v1102
      %v1174 = vmul.f32 %v558, %v1104
      %v1175 = vmul.f32 %v559, %v1106
      %v1176 = vmul.f32 %v560, %v1108
      %v1177 = vmul.f32 %v561, %v1110
      %v1178 = vmul.f32 %v562, %v1112
      %v1179 = vmul.f32 %v563, %v1114
      %v1180 = vmul.f32 %v564, %v1116
      %v1182 = vsel %vm634, %v1149, 0
      %v1185 = vsel %vm634, %v1150, 0
      %v1188 = vsel %vm634, %v1151, 0
      %v1191 = vsel %vm634, %v1152, 0
      %v1194 = vsel %vm634, %v1153, 0
      %v1197 = vsel %vm634, %v1154, 0
      %v1200 = vsel %vm634, %v1155, 0
      %v1203 = vsel %vm634, %v1156, 0
      %v1206 = vsel %vm634, %v1157, 0
      %v1209 = vsel %vm634, %v1158, 0
      %v1212 = vsel %vm634, %v1159, 0
      %v1215 = vsel %vm634, %v1160, 0
      %v1218 = vsel %vm634, %v1161, 0
      %v1221 = vsel %vm634, %v1162, 0
      %v1224 = vsel %vm634, %v1163, 0
      %v1227 = vsel %vm634, %v1164, 0
      %v1230 = vsel %vm634, %v1165, 0
      %v1233 = vsel %vm634, %v1166, 0
      %v1236 = vsel %vm634, %v1167, 0
      %v1239 = vsel %vm634, %v1168, 0
      %v1242 = vsel %vm634, %v1169, 0
      %v1245 = vsel %vm634, %v1170, 0
      %v1248 = vsel %vm634, %v1171, 0
      %v1251 = vsel %vm634, %v1172, 0
      %v1254 = vsel %vm634, %v1173, 0
      %v1257 = vsel %vm634, %v1174, 0
      %v1260 = vsel %vm634, %v1175, 0
      %v1263 = vsel %vm634, %v1176, 0
      %v1266 = vsel %vm634, %v1177, 0
      %v1269 = vsel %vm634, %v1178, 0
      %v1272 = vsel %vm634, %v1179, 0
      %v1275 = vsel %vm634, %v1180, 0
      %1277 = vmatprep.subr.mxu0 0.0
      %1278 = vmatpush1.msra.mxu0 0.0
      %1279 = vmatprep.subr.mxu0 0.0
      %1280 = vmatpush1.msra.mxu0 0.0
      %1281 = vmatprep.subr.mxu0 0.0
      %1282 = vmatpush1.msra.mxu0 0.0
      %1283 = vmatprep.subr.mxu0 0.0
      %1284 = vmatpush1.msra.mxu0 0.0
      %1285 = vmatprep.subr.mxu0 0.0
      %1286 = vmatpush1.msra.mxu0 0.0
      %1287 = vmatprep.subr.mxu0 0.0
      %1288 = vmatpush1.msra.mxu0 0.0
      %1289 = vmatprep.subr.mxu0 0.0
      %1290 = vmatpush1.msra.mxu0 0.0
      %1291 = vmatprep.subr.mxu0 0.0
      %1292 = vmatpush1.msra.mxu0 0.0
      %1293 = vmatprep.subr.mxu0 0.0
      %1294 = vmatpush1.msra.mxu0 0.0
      %1295 = vmatprep.subr.mxu0 0.0
      %1296 = vmatpush1.msra.mxu0 0.0
      %1297 = vmatprep.subr.mxu0 0.0
      %1298 = vmatpush1.msra.mxu0 0.0
      %1299 = vmatprep.subr.mxu0 0.0
      %1300 = vmatpush1.msra.mxu0 %v569
      %1301 = vmatprep.subr.mxu0 0.0
      %1302 = vmatpush1.msra.mxu0 %v568
      %1303 = vmatprep.subr.mxu0 0.0
      %1304 = vmatpush1.msra.mxu0 %v567
      %1305 = vmatprep.subr.mxu0 0.0
      %1306 = vmatpush1.msra.mxu0 %v566
      %1307 = vmatprep.subr.mxu0 0.0
      %1308 = vmatpush1.msra.mxu0 %v565
      %1309 = vmatprep.subr.mxu0 0.0
      %1310 = vmatpush2.msra.mxu0 0.0
      %1311 = vmatprep.subr.mxu0 0.0
      %1312 = vmatpush2.msra.mxu0 0.0
      %1313 = vmatprep.subr.mxu0 0.0
      %1314 = vmatpush2.msra.mxu0 0.0
      %1315 = vmatprep.subr.mxu0 0.0
      %1316 = vmatpush2.msra.mxu0 0.0
      %1317 = vmatprep.subr.mxu0 0.0
      %1318 = vmatpush2.msra.mxu0 0.0
      %1319 = vmatprep.subr.mxu0 0.0
      %1320 = vmatpush2.msra.mxu0 0.0
      %1321 = vmatprep.subr.mxu0 0.0
      %1322 = vmatpush2.msra.mxu0 0.0
      %1323 = vmatprep.subr.mxu0 0.0
      %1324 = vmatpush2.msra.mxu0 0.0
      %1325 = vmatprep.subr.mxu0 0.0
      %1326 = vmatpush2.msra.mxu0 0.0
      %1327 = vmatprep.subr.mxu0 0.0
      %1328 = vmatpush2.msra.mxu0 0.0
      %1329 = vmatprep.subr.mxu0 0.0
      %1330 = vmatpush2.msra.mxu0 0.0
      %1331 = vmatprep.subr.mxu0 0.0
      %1332 = vmatpush2.msra.mxu0 0.0
      %1333 = vmatprep.subr.mxu0 0.0
      %1334 = vmatpush2.msra.mxu0 0.0
      %1335 = vmatprep.subr.mxu0 0.0
      %1336 = vmatpush2.msra.mxu0 0.0
      %1337 = vmatprep.subr.mxu0 0.0
      %1338 = vmatpush2.msra.mxu0 0.0
      %1339 = vmatprep.subr.mxu0 0.0
      %1340 = vmatpush2.msra.mxu0 0.0
      %1341 = vmatprep.mubr.f32.mxu0 0.0
      %1342 = vmatmul.mubr.f32.gmra.mxu0 %v1182
      %v1343 = vpop.f32.mrf.mxu0
      %v1344 = vadd.f32 0.0, %v1343
      %v1345 = vpop.f32.mrf.mxu0
      %1346 = vmatprep.mubr.f32.mxu0 0.0
      %1347 = vmatmul.mubr.f32.gmra.mxu0 %v1185
      %v1348 = vpop.f32.mrf.mxu0
      %v1349 = vadd.f32 0.0, %v1348
      %v1350 = vpop.f32.mrf.mxu0
      %1351 = vmatprep.mubr.f32.mxu0 0.0
      %1352 = vmatmul.mubr.f32.gmra.mxu0 %v1188
      %v1353 = vpop.f32.mrf.mxu0
      %v1354 = vadd.f32 0.0, %v1353
      %v1355 = vpop.f32.mrf.mxu0
      %1356 = vmatprep.mubr.f32.mxu0 0.0
      %1357 = vmatmul.mubr.f32.gmra.mxu0 %v1191
      %v1358 = vpop.f32.mrf.mxu0
      %v1359 = vadd.f32 0.0, %v1358
      %v1360 = vpop.f32.mrf.mxu0
      %1361 = vmatprep.mubr.f32.mxu0 0.0
      %1362 = vmatmul.mubr.f32.gmra.mxu0 %v1194
      %v1363 = vpop.f32.mrf.mxu0
      %v1364 = vadd.f32 0.0, %v1363
      %v1365 = vpop.f32.mrf.mxu0
      %1366 = vmatprep.mubr.f32.mxu0 0.0
      %1367 = vmatmul.mubr.f32.gmra.mxu0 %v1197
      %v1368 = vpop.f32.mrf.mxu0
      %v1369 = vadd.f32 0.0, %v1368
      %v1370 = vpop.f32.mrf.mxu0
      %1371 = vmatprep.mubr.f32.mxu0 0.0
      %1372 = vmatmul.mubr.f32.gmra.mxu0 %v1200
      %v1373 = vpop.f32.mrf.mxu0
      %v1374 = vadd.f32 0.0, %v1373
      %v1375 = vpop.f32.mrf.mxu0
      %1376 = vmatprep.mubr.f32.mxu0 0.0
      %1377 = vmatmul.mubr.f32.gmra.mxu0 %v1203
      %v1378 = vpop.f32.mrf.mxu0
      %v1379 = vadd.f32 0.0, %v1378
      %v1380 = vpop.f32.mrf.mxu0
      %1381 = vmatprep.mubr.f32.mxu0 0.0
      %1382 = vmatmul.mubr.f32.gmra.mxu0 %v1206
      %v1383 = vpop.f32.mrf.mxu0
      %v1384 = vadd.f32 0.0, %v1383
      %v1385 = vpop.f32.mrf.mxu0
      %1386 = vmatprep.mubr.f32.mxu0 0.0
      %1387 = vmatmul.mubr.f32.gmra.mxu0 %v1209
      %v1388 = vpop.f32.mrf.mxu0
      %v1389 = vadd.f32 0.0, %v1388
      %v1390 = vpop.f32.mrf.mxu0
      %1391 = vmatprep.mubr.f32.mxu0 0.0
      %1392 = vmatmul.mubr.f32.gmra.mxu0 %v1212
      %v1393 = vpop.f32.mrf.mxu0
      %v1394 = vadd.f32 0.0, %v1393
      %v1395 = vpop.f32.mrf.mxu0
      %1396 = vmatprep.mubr.f32.mxu0 0.0
      %1397 = vmatmul.mubr.f32.gmra.mxu0 %v1215
      %v1398 = vpop.f32.mrf.mxu0
      %v1399 = vadd.f32 0.0, %v1398
      %v1400 = vpop.f32.mrf.mxu0
      %1401 = vmatprep.mubr.f32.mxu0 0.0
      %1402 = vmatmul.mubr.f32.gmra.mxu0 %v1218
      %v1403 = vpop.f32.mrf.mxu0
      %v1404 = vadd.f32 0.0, %v1403
      %v1405 = vpop.f32.mrf.mxu0
      %1406 = vmatprep.mubr.f32.mxu0 0.0
      %1407 = vmatmul.mubr.f32.gmra.mxu0 %v1221
      %v1408 = vpop.f32.mrf.mxu0
      %v1409 = vadd.f32 0.0, %v1408
      %v1410 = vpop.f32.mrf.mxu0
      %1411 = vmatprep.mubr.f32.mxu0 0.0
      %1412 = vmatmul.mubr.f32.gmra.mxu0 %v1224
      %v1413 = vpop.f32.mrf.mxu0
      %v1414 = vadd.f32 0.0, %v1413
      %v1415 = vpop.f32.mrf.mxu0
      %1416 = vmatprep.mubr.f32.mxu0 0.0
      %1417 = vmatmul.mubr.f32.gmra.mxu0 %v1227
      %v1418 = vpop.f32.mrf.mxu0
      %v1419 = vadd.f32 0.0, %v1418
      %v1420 = vpop.f32.mrf.mxu0
      %1421 = vmatprep.mubr.f32.mxu0 0.0
      %1422 = vmatmul.mubr.f32.gmra.mxu0 %v1230
      %v1423 = vpop.f32.mrf.mxu0
      %v1424 = vadd.f32 0.0, %v1423
      %v1425 = vpop.f32.mrf.mxu0
      %1426 = vmatprep.mubr.f32.mxu0 0.0
      %1427 = vmatmul.mubr.f32.gmra.mxu0 %v1233
      %v1428 = vpop.f32.mrf.mxu0
      %v1429 = vadd.f32 0.0, %v1428
      %v1430 = vpop.f32.mrf.mxu0
      %1431 = vmatprep.mubr.f32.mxu0 0.0
      %1432 = vmatmul.mubr.f32.gmra.mxu0 %v1236
      %v1433 = vpop.f32.mrf.mxu0
      %v1434 = vadd.f32 0.0, %v1433
      %v1435 = vpop.f32.mrf.mxu0
      %1436 = vmatprep.mubr.f32.mxu0 0.0
      %1437 = vmatmul.mubr.f32.gmra.mxu0 %v1239
      %v1438 = vpop.f32.mrf.mxu0
      %v1439 = vadd.f32 0.0, %v1438
      %v1440 = vpop.f32.mrf.mxu0
      %1441 = vmatprep.mubr.f32.mxu0 0.0
      %1442 = vmatmul.mubr.f32.gmra.mxu0 %v1242
      %v1443 = vpop.f32.mrf.mxu0
      %v1444 = vadd.f32 0.0, %v1443
      %v1445 = vpop.f32.mrf.mxu0
      %1446 = vmatprep.mubr.f32.mxu0 0.0
      %1447 = vmatmul.mubr.f32.gmra.mxu0 %v1245
      %v1448 = vpop.f32.mrf.mxu0
      %v1449 = vadd.f32 0.0, %v1448
      %v1450 = vpop.f32.mrf.mxu0
      %1451 = vmatprep.mubr.f32.mxu0 0.0
      %1452 = vmatmul.mubr.f32.gmra.mxu0 %v1248
      %v1453 = vpop.f32.mrf.mxu0
      %v1454 = vadd.f32 0.0, %v1453
      %v1455 = vpop.f32.mrf.mxu0
      %1456 = vmatprep.mubr.f32.mxu0 0.0
      %1457 = vmatmul.mubr.f32.gmra.mxu0 %v1251
      %v1458 = vpop.f32.mrf.mxu0
      %v1459 = vadd.f32 0.0, %v1458
      %v1460 = vpop.f32.mrf.mxu0
      %1461 = vmatprep.mubr.f32.mxu0 0.0
      %1462 = vmatmul.mubr.f32.gmra.mxu0 %v1254
      %v1463 = vpop.f32.mrf.mxu0
      %v1464 = vadd.f32 0.0, %v1463
      %v1465 = vpop.f32.mrf.mxu0
      %1466 = vmatprep.mubr.f32.mxu0 0.0
      %1467 = vmatmul.mubr.f32.gmra.mxu0 %v1257
      %v1468 = vpop.f32.mrf.mxu0
      %v1469 = vadd.f32 0.0, %v1468
      %v1470 = vpop.f32.mrf.mxu0
      %1471 = vmatprep.mubr.f32.mxu0 0.0
      %1472 = vmatmul.mubr.f32.gmra.mxu0 %v1260
      %v1473 = vpop.f32.mrf.mxu0
      %v1474 = vadd.f32 0.0, %v1473
      %v1475 = vpop.f32.mrf.mxu0
      %1476 = vmatprep.mubr.f32.mxu0 0.0
      %1477 = vmatmul.mubr.f32.gmra.mxu0 %v1263
      %v1478 = vpop.f32.mrf.mxu0
      %v1479 = vadd.f32 0.0, %v1478
      %v1480 = vpop.f32.mrf.mxu0
      %1481 = vmatprep.mubr.f32.mxu0 0.0
      %1482 = vmatmul.mubr.f32.gmra.mxu0 %v1266
      %v1483 = vpop.f32.mrf.mxu0
      %v1484 = vadd.f32 0.0, %v1483
      %v1485 = vpop.f32.mrf.mxu0
      %1486 = vmatprep.mubr.f32.mxu0 0.0
      %1487 = vmatmul.mubr.f32.gmra.mxu0 %v1269
      %v1488 = vpop.f32.mrf.mxu0
      %v1489 = vadd.f32 0.0, %v1488
      %v1490 = vpop.f32.mrf.mxu0
      %1491 = vmatprep.mubr.f32.mxu0 0.0
      %1492 = vmatmul.mubr.f32.gmra.mxu0 %v1272
      %v1493 = vpop.f32.mrf.mxu0
      %v1494 = vadd.f32 0.0, %v1493
      %v1495 = vpop.f32.mrf.mxu0
      %1496 = vmatprep.mubr.f32.mxu0 0.0
      %1497 = vmatmul.mubr.f32.gmra.mxu0 %v1275
      %v1498 = vpop.f32.mrf.mxu0
      %v1499 = vadd.f32 0.0, %v1498
      %v1500 = vpop.f32.mrf.mxu0
      %1501 = vdwg.mxu0
      %s1502 = scalar_lea.vmem %s307, 256
      %1503 = vst.msk [vmem:[%s1502] sm:$0xff] %vm956, %v1344
      %1504 = vst.msk [vmem:[%s1502 + $0x8] sm:$0xff] %vm956, %v1349
      %1505 = vst.msk [vmem:[%s1502 + $0x10] sm:$0xff] %vm956, %v1354
      %1506 = vst.msk [vmem:[%s1502 + $0x18] sm:$0xff] %vm956, %v1359
      %1507 = vst.msk [vmem:[%s1502 + $0x20] sm:$0xff] %vm956, %v1364
      %1508 = vst.msk [vmem:[%s1502 + $0x28] sm:$0xff] %vm956, %v1369
      %1509 = vst.msk [vmem:[%s1502 + $0x30] sm:$0xff] %vm956, %v1374
      %1510 = vst.msk [vmem:[%s1502 + $0x38] sm:$0xff] %vm956, %v1379
      %1511 = vst.msk [vmem:[%s1502 + $0x40] sm:$0xff] %vm956, %v1384
      %1512 = vst.msk [vmem:[%s1502 + $0x48] sm:$0xff] %vm956, %v1389
      %1513 = vst.msk [vmem:[%s1502 + $0x50] sm:$0xff] %vm956, %v1394
      %1514 = vst.msk [vmem:[%s1502 + $0x58] sm:$0xff] %vm956, %v1399
      %1515 = vst.msk [vmem:[%s1502 + $0x60] sm:$0xff] %vm956, %v1404
      %1516 = vst.msk [vmem:[%s1502 + $0x68] sm:$0xff] %vm956, %v1409
      %1517 = vst.msk [vmem:[%s1502 + $0x70] sm:$0xff] %vm956, %v1414
      %1518 = vst.msk [vmem:[%s1502 + $0x78] sm:$0xff] %vm956, %v1419
      %1519 = vst.msk [vmem:[%s1502 + $0x80] sm:$0xff] %vm956, %v1424
      %1520 = vst.msk [vmem:[%s1502 + $0x88] sm:$0xff] %vm956, %v1429
      %1521 = vst.msk [vmem:[%s1502 + $0x90] sm:$0xff] %vm956, %v1434
      %1522 = vst.msk [vmem:[%s1502 + $0x98] sm:$0xff] %vm956, %v1439
      %1523 = vst.msk [vmem:[%s1502 + $0xa0] sm:$0xff] %vm956, %v1444
      %1524 = vst.msk [vmem:[%s1502 + $0xa8] sm:$0xff] %vm956, %v1449
      %1525 = vst.msk [vmem:[%s1502 + $0xb0] sm:$0xff] %vm956, %v1454
      %1526 = vst.msk [vmem:[%s1502 + $0xb8] sm:$0xff] %vm956, %v1459
      %1527 = vst.msk [vmem:[%s1502 + $0xc0] sm:$0xff] %vm956, %v1464
      %1528 = vst.msk [vmem:[%s1502 + $0xc8] sm:$0xff] %vm956, %v1469
      %1529 = vst.msk [vmem:[%s1502 + $0xd0] sm:$0xff] %vm956, %v1474
      %1530 = vst.msk [vmem:[%s1502 + $0xd8] sm:$0xff] %vm956, %v1479
      %1531 = vst.msk [vmem:[%s1502 + $0xe0] sm:$0xff] %vm956, %v1484
      %1532 = vst.msk [vmem:[%s1502 + $0xe8] sm:$0xff] %vm956, %v1489
      %1533 = vst.msk [vmem:[%s1502 + $0xf0] sm:$0xff] %vm956, %v1494
      %1534 = vst.msk [vmem:[%s1502 + $0xf8] sm:$0xff] %vm956, %v1499
      %s1535 = smul.u32 32, %s20
      %p1536 = scmp.lt.s32.totalorder %s19, 1
      %s1537 = scalar_select %p1536, %s19, 1
      %p1538 = scmp.lt.s32.totalorder %s1535, 31
      %s1539 = scalar_select %p1538, %s1535, 31
      %s1540 = smul.addr %s1537, 64
      %s1541 = sadd.s32 %s1539, %s1540
      %s1542 = smul.addr %s1541, 8
      %s1543 = scalar_lea.vmem %s4, %s1542
      // Predicated region
      $region37: #{tpu_custom_call.1} parent=35 // pred_check
        %p1544 = pneg %p152
      $region38: #{tpu_custom_call.1} parent=35 // pred_check_branch
        %1546 = sbr.rel (%p1544) target = $region40
      $region39: #{tpu_custom_call.1} parent=35 // pred_region
        %s1547 = smul.u32 32, %s20
      $region40: #{tpu_custom_call.1} parent=35 // pred_fallthru
        _
    $region36: #{tpu_custom_call.1} parent=5 // pred_fallthru
      _
    %p1548 = scmp.le.s32.totalorder 2, %s10
    // Predicated region
    $region41: #{tpu_custom_call.1} parent=5 // pred_check
      %p1549 = pneg %p1548
    $region42: #{tpu_custom_call.1} parent=5 // pred_check_branch
      %1551 = sbr.rel (%p1549) target = $region44
    $region43: #{tpu_custom_call.1} parent=5 // pred_region
      %s1552 = ssub.s32 %s10, 2
      // Predicated region
      $region45: #{tpu_custom_call.1} parent=43 // pred_check
        %p1553 = pneg %p158
      $region46: #{tpu_custom_call.1} parent=43 // pred_check_branch
        %1555 = sbr.rel (%p1553) target = $region48
      $region47: #{tpu_custom_call.1} parent=43 // pred_region
        %s1556 = smul.u32 32, %s22
        %p1557 = scmp.lt.s32.totalorder %s21, 1
        %s1558 = scalar_select %p1557, %s21, 1
        %p1559 = scmp.lt.s32.totalorder %s1556, 31
        %s1560 = scalar_select %p1559, %s1556, 31
        %s1561 = smul.addr %s1558, 64
        %s1562 = sadd.s32 %s1560, %s1561
        %s1563 = smul.addr %s1562, 8
        %s1564 = scalar_lea.vmem %s4, %s1563
      $region48: #{tpu_custom_call.1} parent=43 // pred_fallthru
        _
    $region44: #{tpu_custom_call.1} parent=5 // pred_fallthru
      _
  $region6: #{tpu_custom_call.1} parent=0 // loop_footer
    %s14 = sadd.s32 1, %s10
  $region7: #{tpu_custom_call.1} parent=0 // loop_footer_branch
    %9 = sbr.rel target = $region3
  $region8: #{tpu_custom_call.1} parent=0 // loop_exit
    _

</llo_original>
